<compile_context>
chip_gen: v7x
topology: tpu7x:2x2x1
jax: 0.10.0
libtpu: 0.0.40
codegen_flags: <defaults>
</compile_context>

<pallas_src>
import jax
import jax.numpy as jnp
from jax.experimental import pallas as pl
from jax.experimental.pallas import tpu as pltpu

LANE = 128  # TPU lane width


def _round_up(x, m):
    return ((x + m - 1) // m) * m


def _pad2d(a, rows, cols):
    return jnp.pad(a, ((0, rows - a.shape[0]), (0, cols - a.shape[1])))


def qnetwork_kernel(x_ref, w1_ref, b1_ref, w2_ref, b2_ref, w3_ref, b3_ref, out_ref):
    # fc1 + ReLU (f32 accumulation on the MXU, f32 bias)
    h1 = jnp.dot(x_ref[...], w1_ref[...], preferred_element_type=jnp.float32)
    h1 = jnp.maximum(h1 + b1_ref[...], 0.0)
    # fc2 + ReLU
    h2 = jnp.dot(h1.astype(w2_ref.dtype), w2_ref[...],
                 preferred_element_type=jnp.float32)
    h2 = jnp.maximum(h2 + b2_ref[...], 0.0)
    # fc3 (Q-values, no activation)
    q = jnp.dot(h2.astype(w3_ref.dtype), w3_ref[...],
                preferred_element_type=jnp.float32)
    out_ref[...] = (q + b3_ref[...]).astype(out_ref.dtype)


def init_params(key, state_size, action_size, fc1_units=64, fc2_units=128):
    """Deterministic init mimicking PyTorch Linear default U[-1/sqrt(fan_in), ...]."""
    ks = jax.random.split(key, 6)

    def linear(kw, kb, fan_in, fan_out):
        bound = 1.0 / jnp.sqrt(jnp.float32(fan_in))
        w = jax.random.uniform(kw, (fan_in, fan_out), jnp.float32, -bound, bound)
        b = jax.random.uniform(kb, (1, fan_out), jnp.float32, -bound, bound)
        return w, b

    w1, b1 = linear(ks[0], ks[1], state_size, fc1_units)
    w2, b2 = linear(ks[2], ks[3], fc1_units, fc2_units)
    w3, b3 = linear(ks[4], ks[5], fc2_units, action_size)
    return (w1, b1, w2, b2, w3, b3)


def pad_params(params):
    """Pad ONLY the VMEM-resident weights' hidden/feature dims.

    - state_size (x's feature dim) is NOT padded: x is streamed unpadded.
    - fc1/fc2 hidden dims are padded to 128 lanes (zero columns/rows are inert).
    - action dim is rounded up to 8 only (tiny masked store; sliced off later).
    """
    w1, b1, w2, b2, w3, b3 = params
    f1 = _round_up(w1.shape[1], LANE)   # 64  -> 128
    f2 = _round_up(w2.shape[1], LANE)   # 128 -> 128
    ap = _round_up(w3.shape[1], 8)      # action -> multiple of 8
    padded = (
        _pad2d(w1, w1.shape[0], f1), _pad2d(b1, 1, f1),
        _pad2d(w2, f1, f2),          _pad2d(b2, 1, f2),
        _pad2d(w3, f2, ap),          _pad2d(b3, 1, ap),
    )
    return padded


def qnetwork_forward(x, padded_params, state_size, action_size, *,
                     tb_max=4096, compute_dtype=jnp.bfloat16):
    """Fused forward pass. `padded_params` come from pad_params(init_params(...))."""
    w1, b1, w2, b2, w3, b3 = padded_params
    sp, f1 = w1.shape          # sp == state_size (unpadded), f1 == 128
    f2, ap = w3.shape          # f2 == 128, ap == round_up(action_size, 8)
    batch = x.shape[0]

    # Batch tile: multiple of 8 sublanes, capped at tb_max. For batch >= 16 cap
    # at ~batch/2 so the grid has >= 2 steps and "parallel" shards across both
    # TensorCores on v7x.
    tb = min(tb_max, _round_up(batch, 8))
    if batch >= 16:
        tb = min(tb, _round_up(-(-batch // 2), 8))
    b_pad = _round_up(batch, tb)
    grid = (b_pad // tb,)

    # Only batch-row padding (no lane padding, no big scratch HBM buffer).
    xc = x.astype(compute_dtype)
    if b_pad != batch:
        xc = jnp.pad(xc, ((0, b_pad - batch), (0, 0)))

    # bf16 operands halve the x DMA stream on v6e/v7x; biases / accum stay f32.
    w1c = w1.astype(compute_dtype)
    w2c = w2.astype(compute_dtype)
    w3c = w3.astype(compute_dtype)

    itemsize = jnp.dtype(compute_dtype).itemsize
    weight_bytes = sum(int(a.size) * int(a.dtype.itemsize)
                       for a in (w1c, b1, w2c, b2, w3c, b3))
    cost = pl.CostEstimate(
        flops=2 * b_pad * (sp * f1 + f1 * f2 + f2 * ap),
        transcendentals=0,
        bytes_accessed=b_pad * sp * itemsize + weight_bytes + b_pad * ap * 4,
    )

    batch_spec = lambda shape: pl.BlockSpec(shape, lambda i: (i, 0))
    resident_spec = lambda shape: pl.BlockSpec(shape, lambda i: (0, 0))

    out = pl.pallas_call(
        qnetwork_kernel,
        out_shape=jax.ShapeDtypeStruct((b_pad, ap), jnp.float32),
        grid=grid,
        in_specs=[
            batch_spec((tb, sp)),          # x tile, pipelined per grid step (unpadded lanes)
            resident_spec((sp, f1)),       # w1 (VMEM-resident, constant index)
            resident_spec((1, f1)),        # b1
            resident_spec((f1, f2)),       # w2
            resident_spec((1, f2)),        # b2
            resident_spec((f2, ap)),       # w3
            resident_spec((1, ap)),        # b3
        ],
        out_specs=batch_spec((tb, ap)),
        compiler_params=pltpu.CompilerParams(
            dimension_semantics=("parallel",),   # shard batch grid across TCs (v7x)
        ),
        cost_estimate=cost,
    )(xc, w1c, b1, w2c, b2, w3c, b3)

    return out[:batch, :action_size]


def reference_forward(x, params):
    w1, b1, w2, b2, w3, b3 = params
    h1 = jnp.maximum(x @ w1 + b1, 0.0)
    h2 = jnp.maximum(h1 @ w2 + b2, 0.0)
    return h2 @ w3 + b3


if __name__ == "__main__":
    state_size = 8
    action_size = 4

    key = jax.random.PRNGKey(0)
    k_params, k_x1, k_x2 = jax.random.split(key, 3)
    params = init_params(k_params, state_size, action_size)
    padded_params = pad_params(params)

    # Small batch, f32 compute path: exact match vs reference.
    x = jax.random.normal(k_x1, (2, state_size), dtype=jnp.float32)
    out = qnetwork_forward(x, padded_params, state_size, action_size,
                           compute_dtype=jnp.float32)
    out = jax.block_until_ready(out)
    ref = reference_forward(x, params)
    assert out.shape == (2, action_size)
    assert jnp.allclose(out, ref, atol=1e-5, rtol=1e-5)

    # Ragged larger batch (exercises multi-step grid + row padding), f32 path.
    x_big = jax.random.normal(k_x2, (100, state_size), dtype=jnp.float32)
    out_big = jax.block_until_ready(
        qnetwork_forward(x_big, padded_params, state_size, action_size,
                         compute_dtype=jnp.float32))
    ref_big = reference_forward(x_big, params)
    assert out_big.shape == (100, action_size)
    assert jnp.allclose(out_big, ref_big, atol=1e-5, rtol=1e-5)

    # Default bf16 operand path (f32 accumulation): loose tolerance vs f32 ref.
    out_bf16 = jax.block_until_ready(
        qnetwork_forward(x_big, padded_params, state_size, action_size))
    assert jnp.allclose(out_bf16, ref_big, atol=5e-2, rtol=5e-2)

    print("KERNEL_OK")
</pallas_src>

<mosaic_0001>
module attributes {stable_mosaic.version = 11 : i64} {
  func.func @qnetwork_kernel(%arg0: i32, %arg1: memref<8x8xf32, #tpu.memory_space<vmem>>, %arg2: memref<8x128xf32, #tpu.memory_space<vmem>>, %arg3: memref<1x128xf32, #tpu.memory_space<vmem>>, %arg4: memref<128x128xf32, #tpu.memory_space<vmem>>, %arg5: memref<1x128xf32, #tpu.memory_space<vmem>>, %arg6: memref<128x8xf32, #tpu.memory_space<vmem>>, %arg7: memref<1x8xf32, #tpu.memory_space<vmem>>, %arg8: memref<8x8xf32, #tpu.memory_space<vmem>>) attributes {dimension_semantics = [#tpu.dimension_semantics<parallel>], iteration_bounds = array<i64: 1>, scalar_prefetch = 0 : i64, scratch_operands = 0 : i64, tpu.core_type = #tpu.core_type<tc>, window_params = [{transform_indices = @transform_0, window_bounds = array<i64: 8, 8>}, {pipeline_mode = #tpu.pipeline_mode<synchronous>, transform_indices = @transform_1, window_bounds = array<i64: 8, 128>}, {pipeline_mode = #tpu.pipeline_mode<synchronous>, transform_indices = @transform_2, window_bounds = array<i64: 1, 128>}, {pipeline_mode = #tpu.pipeline_mode<synchronous>, transform_indices = @transform_3, window_bounds = array<i64: 128, 128>}, {pipeline_mode = #tpu.pipeline_mode<synchronous>, transform_indices = @transform_4, window_bounds = array<i64: 1, 128>}, {pipeline_mode = #tpu.pipeline_mode<synchronous>, transform_indices = @transform_5, window_bounds = array<i64: 128, 8>}, {pipeline_mode = #tpu.pipeline_mode<synchronous>, transform_indices = @transform_6, window_bounds = array<i64: 1, 8>}, {transform_indices = @transform_7, window_bounds = array<i64: 8, 8>}]} {
    %c0 = arith.constant 0 : index
    %c0_0 = arith.constant 0 : index
    %0 = vector.load %arg1[%c0, %c0_0] : memref<8x8xf32, #tpu.memory_space<vmem>>, vector<8x8xf32>
    %c0_1 = arith.constant 0 : index
    %c0_2 = arith.constant 0 : index
    %1 = vector.load %arg2[%c0_1, %c0_2] : memref<8x128xf32, #tpu.memory_space<vmem>>, vector<8x128xf32>
    %cst = arith.constant dense<0.000000e+00> : vector<8x128xf32>
    %2 = tpu.matmul %0, %1, %cst {dimension_numbers = #tpu.dot_dimension_numbers<[1], [0], [0], [1], [0, 0, 1, 1], [], []>} : vector<8x8xf32>, vector<8x128xf32>, vector<8x128xf32> -> vector<8x128xf32>
    %c0_3 = arith.constant 0 : index
    %c0_4 = arith.constant 0 : index
    %3 = vector.load %arg3[%c0_3, %c0_4] : memref<1x128xf32, #tpu.memory_space<vmem>>, vector<1x128xf32>
    %4 = vector.broadcast %3 : vector<1x128xf32> to vector<8x128xf32>
    %5 = arith.addf %2, %4 : vector<8x128xf32>
    %cst_5 = arith.constant 0.000000e+00 : f32
    %6 = vector.broadcast %cst_5 : f32 to vector<8x128xf32>
    %7 = arith.maximumf %5, %6 : vector<8x128xf32>
    %c0_6 = arith.constant 0 : index
    %c0_7 = arith.constant 0 : index
    %8 = vector.load %arg4[%c0_6, %c0_7] : memref<128x128xf32, #tpu.memory_space<vmem>>, vector<128x128xf32>
    %cst_8 = arith.constant dense<0.000000e+00> : vector<8x128xf32>
    %9 = tpu.matmul %7, %8, %cst_8 {dimension_numbers = #tpu.dot_dimension_numbers<[1], [0], [0], [1], [0, 0, 1, 1], [], []>} : vector<8x128xf32>, vector<128x128xf32>, vector<8x128xf32> -> vector<8x128xf32>
    %c0_9 = arith.constant 0 : index
    %c0_10 = arith.constant 0 : index
    %10 = vector.load %arg5[%c0_9, %c0_10] : memref<1x128xf32, #tpu.memory_space<vmem>>, vector<1x128xf32>
    %11 = vector.broadcast %10 : vector<1x128xf32> to vector<8x128xf32>
    %12 = arith.addf %9, %11 : vector<8x128xf32>
    %cst_11 = arith.constant 0.000000e+00 : f32
    %13 = vector.broadcast %cst_11 : f32 to vector<8x128xf32>
    %14 = arith.maximumf %12, %13 : vector<8x128xf32>
    %c0_12 = arith.constant 0 : index
    %c0_13 = arith.constant 0 : index
    %15 = vector.load %arg6[%c0_12, %c0_13] : memref<128x8xf32, #tpu.memory_space<vmem>>, vector<128x8xf32>
    %cst_14 = arith.constant dense<0.000000e+00> : vector<8x8xf32>
    %16 = tpu.matmul %14, %15, %cst_14 {dimension_numbers = #tpu.dot_dimension_numbers<[1], [0], [0], [1], [0, 0, 1, 1], [], []>} : vector<8x128xf32>, vector<128x8xf32>, vector<8x8xf32> -> vector<8x8xf32>
    %c0_15 = arith.constant 0 : index
    %c0_16 = arith.constant 0 : index
    %17 = vector.load %arg7[%c0_15, %c0_16] : memref<1x8xf32, #tpu.memory_space<vmem>>, vector<1x8xf32>
    %18 = vector.broadcast %17 : vector<1x8xf32> to vector<8x8xf32>
    %19 = arith.addf %16, %18 : vector<8x8xf32>
    %c0_17 = arith.constant 0 : index
    %c0_18 = arith.constant 0 : index
    %20 = vector.load %arg8[%c0_17, %c0_18] : memref<8x8xf32, #tpu.memory_space<vmem>>, vector<8x8xf32>
    tpu.vector_store %arg8[%c0_17, %c0_18], %19 {strides = array<i32>} : memref<8x8xf32, #tpu.memory_space<vmem>>, vector<8x8xf32>,
    return
  }
  func.func @transform_0(%arg0: i32) -> (i32, i32) {
    %c0_i32 = arith.constant 0 : i32
    %c0_i32_0 = arith.constant 0 : i32
    return %arg0, %c0_i32 : i32, i32
  }
  func.func @transform_1(%arg0: i32) -> (i32, i32) {
    %c0_i32 = arith.constant 0 : i32
    %c0_i32_0 = arith.constant 0 : i32
    %c0_i32_1 = arith.constant 0 : i32
    return %c0_i32, %c0_i32_0 : i32, i32
  }
  func.func @transform_2(%arg0: i32) -> (i32, i32) {
    %c0_i32 = arith.constant 0 : i32
    %c0_i32_0 = arith.constant 0 : i32
    %c0_i32_1 = arith.constant 0 : i32
    return %c0_i32, %c0_i32_0 : i32, i32
  }
  func.func @transform_3(%arg0: i32) -> (i32, i32) {
    %c0_i32 = arith.constant 0 : i32
    %c0_i32_0 = arith.constant 0 : i32
    %c0_i32_1 = arith.constant 0 : i32
    return %c0_i32, %c0_i32_0 : i32, i32
  }
  func.func @transform_4(%arg0: i32) -> (i32, i32) {
    %c0_i32 = arith.constant 0 : i32
    %c0_i32_0 = arith.constant 0 : i32
    %c0_i32_1 = arith.constant 0 : i32
    return %c0_i32, %c0_i32_0 : i32, i32
  }
  func.func @transform_5(%arg0: i32) -> (i32, i32) {
    %c0_i32 = arith.constant 0 : i32
    %c0_i32_0 = arith.constant 0 : i32
    %c0_i32_1 = arith.constant 0 : i32
    return %c0_i32, %c0_i32_0 : i32, i32
  }
  func.func @transform_6(%arg0: i32) -> (i32, i32) {
    %c0_i32 = arith.constant 0 : i32
    %c0_i32_0 = arith.constant 0 : i32
    %c0_i32_1 = arith.constant 0 : i32
    return %c0_i32, %c0_i32_0 : i32, i32
  }
  func.func @transform_7(%arg0: i32) -> (i32, i32) {
    %c0_i32 = arith.constant 0 : i32
    %c0_i32_0 = arith.constant 0 : i32
    return %arg0, %c0_i32 : i32, i32
  }
}

</mosaic_0001>

<llo_original>
// kernel: tpu_custom_call.1
$region0: #{tpu_custom_call.1}
  #allocation0 [shape = 'u32[]', space=smem, size = 0x4, offset = 0x4, fixed_abs, tag = 'smem constant byte address 0x4 - core index']
  #allocation1 [shape = 'u32[144,128]{1,0:T(1,128)}', space=vmem, size = 0x12000, scoped, tag = 'internal scratch']
  %s0 = inlined_call_operand.vmem [shape: f32[8,8], index: 0, kind: input, shape index: {}]
  %s1 = inlined_call_operand.hbm [shape: f32[8,128], index: 1, kind: input, shape index: {}]
  %s2 = inlined_call_operand.vmem [shape: f32[1,128], index: 2, kind: input, shape index: {}]
  %s3 = inlined_call_operand.vmem [shape: f32[128,128], index: 3, kind: input, shape index: {}]
  %s4 = inlined_call_operand.vmem [shape: f32[1,128], index: 4, kind: input, shape index: {}]
  %s5 = inlined_call_operand.vmem [shape: f32[128,8], index: 5, kind: input, shape index: {}]
  %s6 = inlined_call_operand.vmem [shape: f32[1,8], index: 6, kind: input, shape index: {}]
  %s7 = inlined_call_operand.hbm [shape: f32[8,8], index: 7, kind: output, shape index: {}]
  %s8 = sld [smem:[#allocation0]]
  $region42: #{tpu_custom_call.1} parent=0
    _
  %s10 = ssub.s32 1, %s8
  %s11 = scalar_select 0, %s10, %s8
  $region1: #{tpu_custom_call.1} parent=0
    #allocation2 [shape = 'u8[4096]{0}', space=vmem, size = 0x1000, scoped, tag = 'input window, operand 1, single buffered']
    #allocation3 [shape = 's32[1]{0}', space=sflag, size = 0x4, scoped, tag = 'scoped memory for tpu_custom_call.1']
    #allocation4 [shape = 's32[1]{0}', space=sflag, size = 0x4, scoped, tag = 'scoped memory for tpu_custom_call.1']
    #allocation5 [shape = 'u8[4096]{0}', space=vmem, size = 0x1000, scoped, tag = 'output window, operand 0, single buffered']
    %12 = vsyncpa [#allocation3], 0
    %13 = vsyncpa [#allocation4], 0
    // Predicated region
    $region2: #{tpu_custom_call.1} parent=1 // pred_check
      _
    $region3: #{tpu_custom_call.1} parent=1 // pred_check_branch
      %15 = sbr.rel (0) target = $region5
    $region4: #{tpu_custom_call.1} parent=1 // pred_region
      _
    $region5: #{tpu_custom_call.1} parent=1 // pred_fallthru
      _
    // Predicated region
    $region6: #{tpu_custom_call.1} parent=1 // pred_check
      _
    $region7: #{tpu_custom_call.1} parent=1 // pred_check_branch
      %17 = sbr.rel (0) target = $region9
    $region8: #{tpu_custom_call.1} parent=1 // pred_region
      %s19 = ssub.s32 128, 128
      %20 = vsyncadd [#allocation3], %s19
      %s22 = sshll.u32 [#allocation2], 4
      %s23 = int_to_ptr.vmem [resolvable:$true] %s22
      %25 = dma.hbm_to_vmem [thread:$0]  %s1, 128, %s23, [#allocation3]
    $region9: #{tpu_custom_call.1} parent=1 // pred_fallthru
      _
    // Predicated region
    $region10: #{tpu_custom_call.1} parent=1 // pred_check
      _
    $region11: #{tpu_custom_call.1} parent=1 // pred_check_branch
      %27 = sbr.rel (0) target = $region13
    $region12: #{tpu_custom_call.1} parent=1 // pred_region
      _
    $region13: #{tpu_custom_call.1} parent=1 // pred_fallthru
      _
    // Predicated region
    $region14: #{tpu_custom_call.1} parent=1 // pred_check
      _
    $region15: #{tpu_custom_call.1} parent=1 // pred_check_branch
      %29 = sbr.rel (0) target = $region17
    $region16: #{tpu_custom_call.1} parent=1 // pred_region
      _
    $region17: #{tpu_custom_call.1} parent=1 // pred_fallthru
      _
    // Predicated region
    $region18: #{tpu_custom_call.1} parent=1 // pred_check
      _
    $region19: #{tpu_custom_call.1} parent=1 // pred_check_branch
      %31 = sbr.rel (0) target = $region21
    $region20: #{tpu_custom_call.1} parent=1 // pred_region
      _
    $region21: #{tpu_custom_call.1} parent=1 // pred_fallthru
      _
    // Predicated region
    $region22: #{tpu_custom_call.1} parent=1 // pred_check
      _
    $region23: #{tpu_custom_call.1} parent=1 // pred_check_branch
      %33 = sbr.rel (0) target = $region25
    $region24: #{tpu_custom_call.1} parent=1 // pred_region
      _
    $region25: #{tpu_custom_call.1} parent=1 // pred_fallthru
      _
    // Predicated region
    $region26: #{tpu_custom_call.1} parent=1 // pred_check
      _
    $region27: #{tpu_custom_call.1} parent=1 // pred_check_branch
      %35 = sbr.rel (0) target = $region29
    $region28: #{tpu_custom_call.1} parent=1 // pred_region
      _
    $region29: #{tpu_custom_call.1} parent=1 // pred_fallthru
      _
    // Predicated region
    $region30: #{tpu_custom_call.1} parent=1 // pred_check
      _
    $region31: #{tpu_custom_call.1} parent=1 // pred_check_branch
      %37 = sbr.rel (0) target = $region33
    $region32: #{tpu_custom_call.1} parent=1 // pred_region
      %38 = dma.done [#allocation3], 128
    $region33: #{tpu_custom_call.1} parent=1 // pred_fallthru
      _
    %v39 = vld [vmem:[%s0] sm:$0xff]
    %v40 = vld [vmem:[#allocation2] sm:$0xff]
    %v41 = vld [vmem:[%s2] sm:$0x1]
    %v43 = vlaneseq
    %v44 = vshrl.u32 %v43, 7
    %v45 = vsub.s32 0, %v44
    %v46 = vrot.slane %v41, %v45
    %vm48 = vcmask 64512
    %v50 = vsel %vm48, %v39, 0
    %52 = vmatprep.subr.mxu0 0.0
    %53 = vmatpush1.msra.mxu0 %v40
    %54 = vmatprep.subr.mxu0 0.0
    %55 = vmatpush1.msra.mxu0 0.0
    %56 = vmatprep.subr.mxu0 0.0
    %57 = vmatpush1.msra.mxu0 0.0
    %58 = vmatprep.subr.mxu0 0.0
    %59 = vmatpush1.msra.mxu0 0.0
    %60 = vmatprep.subr.mxu0 0.0
    %61 = vmatpush1.msra.mxu0 0.0
    %62 = vmatprep.subr.mxu0 0.0
    %63 = vmatpush1.msra.mxu0 0.0
    %64 = vmatprep.subr.mxu0 0.0
    %65 = vmatpush1.msra.mxu0 0.0
    %66 = vmatprep.subr.mxu0 0.0
    %67 = vmatpush1.msra.mxu0 0.0
    %68 = vmatprep.subr.mxu0 0.0
    %69 = vmatpush1.msra.mxu0 0.0
    %70 = vmatprep.subr.mxu0 0.0
    %71 = vmatpush1.msra.mxu0 0.0
    %72 = vmatprep.subr.mxu0 0.0
    %73 = vmatpush1.msra.mxu0 0.0
    %74 = vmatprep.subr.mxu0 0.0
    %75 = vmatpush1.msra.mxu0 0.0
    %76 = vmatprep.subr.mxu0 0.0
    %77 = vmatpush1.msra.mxu0 0.0
    %78 = vmatprep.subr.mxu0 0.0
    %79 = vmatpush1.msra.mxu0 0.0
    %80 = vmatprep.subr.mxu0 0.0
    %81 = vmatpush1.msra.mxu0 0.0
    %82 = vmatprep.subr.mxu0 0.0
    %83 = vmatpush1.msra.mxu0 0.0
    %84 = vmatprep.subr.mxu0 0.0
    %85 = vmatpush1.msra.mxu0 0.0
    %86 = vmatprep.subr.mxu0 0.0
    %87 = vmatpush1.msra.mxu0 0.0
    %88 = vmatprep.subr.mxu0 0.0
    %89 = vmatpush1.msra.mxu0 0.0
    %90 = vmatprep.subr.mxu0 0.0
    %91 = vmatpush1.msra.mxu0 0.0
    %92 = vmatprep.subr.mxu0 0.0
    %93 = vmatpush1.msra.mxu0 0.0
    %94 = vmatprep.subr.mxu0 0.0
    %95 = vmatpush1.msra.mxu0 0.0
    %96 = vmatprep.subr.mxu0 0.0
    %97 = vmatpush1.msra.mxu0 0.0
    %98 = vmatprep.subr.mxu0 0.0
    %99 = vmatpush1.msra.mxu0 0.0
    %100 = vmatprep.subr.mxu0 0.0
    %101 = vmatpush1.msra.mxu0 0.0
    %102 = vmatprep.subr.mxu0 0.0
    %103 = vmatpush1.msra.mxu0 0.0
    %104 = vmatprep.subr.mxu0 0.0
    %105 = vmatpush1.msra.mxu0 0.0
    %106 = vmatprep.subr.mxu0 0.0
    %107 = vmatpush1.msra.mxu0 0.0
    %108 = vmatprep.subr.mxu0 0.0
    %109 = vmatpush1.msra.mxu0 0.0
    %110 = vmatprep.subr.mxu0 0.0
    %111 = vmatpush1.msra.mxu0 0.0
    %112 = vmatprep.subr.mxu0 0.0
    %113 = vmatpush1.msra.mxu0 0.0
    %114 = vmatprep.subr.mxu0 0.0
    %115 = vmatpush1.msra.mxu0 0.0
    %116 = vmatprep.mubr.f32.mxu0 0.0
    %117 = vmatmul.mubr.f32.gmra.mrb[0].mxu0 %v50
    %v118 = vpop.f32.mrb[0].mxu0
    %v119 = vadd.f32 %v46, %v118
    %v120 = vpop.f32.mrb[0].mxu0
    %121 = vdwg.mxu0
    %v122 = vmax.f32 %v119, 0.0
    %v123 = vld [vmem:[%s3] sm:$0xff]
    %v124 = vld [vmem:[%s3 + $0x8] sm:$0xff]
    %v125 = vld [vmem:[%s3 + $0x10] sm:$0xff]
    %v126 = vld [vmem:[%s3 + $0x18] sm:$0xff]
    %v127 = vld [vmem:[%s3 + $0x20] sm:$0xff]
    %v128 = vld [vmem:[%s3 + $0x28] sm:$0xff]
    %v129 = vld [vmem:[%s3 + $0x30] sm:$0xff]
    %v130 = vld [vmem:[%s3 + $0x38] sm:$0xff]
    %v131 = vld [vmem:[%s3 + $0x40] sm:$0xff]
    %v132 = vld [vmem:[%s3 + $0x48] sm:$0xff]
    %v133 = vld [vmem:[%s3 + $0x50] sm:$0xff]
    %v134 = vld [vmem:[%s3 + $0x58] sm:$0xff]
    %v135 = vld [vmem:[%s3 + $0x60] sm:$0xff]
    %v136 = vld [vmem:[%s3 + $0x68] sm:$0xff]
    %v137 = vld [vmem:[%s3 + $0x70] sm:$0xff]
    %v138 = vld [vmem:[%s3 + $0x78] sm:$0xff]
    %v139 = vld [vmem:[%s4] sm:$0x1]
    %v141 = vlaneseq
    %v142 = vshrl.u32 %v141, 7
    %v143 = vsub.s32 0, %v142
    %v144 = vrot.slane %v139, %v143
    %146 = vmatprep.subr.mxu0 0.0
    %147 = vmatpush1.msra.mxu0 %v123
    %148 = vmatprep.subr.mxu0 0.0
    %149 = vmatpush1.msra.mxu0 %v124
    %150 = vmatprep.subr.mxu0 0.0
    %151 = vmatpush1.msra.mxu0 %v125
    %152 = vmatprep.subr.mxu0 0.0
    %153 = vmatpush1.msra.mxu0 %v126
    %154 = vmatprep.subr.mxu0 0.0
    %155 = vmatpush1.msra.mxu0 %v127
    %156 = vmatprep.subr.mxu0 0.0
    %157 = vmatpush1.msra.mxu0 %v128
    %158 = vmatprep.subr.mxu0 0.0
    %159 = vmatpush1.msra.mxu0 %v129
    %160 = vmatprep.subr.mxu0 0.0
    %161 = vmatpush1.msra.mxu0 %v130
    %162 = vmatprep.subr.mxu0 0.0
    %163 = vmatpush1.msra.mxu0 %v131
    %164 = vmatprep.subr.mxu0 0.0
    %165 = vmatpush1.msra.mxu0 %v132
    %166 = vmatprep.subr.mxu0 0.0
    %167 = vmatpush1.msra.mxu0 %v133
    %168 = vmatprep.subr.mxu0 0.0
    %169 = vmatpush1.msra.mxu0 %v134
    %170 = vmatprep.subr.mxu0 0.0
    %171 = vmatpush1.msra.mxu0 %v135
    %172 = vmatprep.subr.mxu0 0.0
    %173 = vmatpush1.msra.mxu0 %v136
    %174 = vmatprep.subr.mxu0 0.0
    %175 = vmatpush1.msra.mxu0 %v137
    %176 = vmatprep.subr.mxu0 0.0
    %177 = vmatpush1.msra.mxu0 %v138
    %178 = vmatprep.subr.mxu0 0.0
    %179 = vmatpush1.msra.mxu0 0.0
    %180 = vmatprep.subr.mxu0 0.0
    %181 = vmatpush1.msra.mxu0 0.0
    %182 = vmatprep.subr.mxu0 0.0
    %183 = vmatpush1.msra.mxu0 0.0
    %184 = vmatprep.subr.mxu0 0.0
    %185 = vmatpush1.msra.mxu0 0.0
    %186 = vmatprep.subr.mxu0 0.0
    %187 = vmatpush1.msra.mxu0 0.0
    %188 = vmatprep.subr.mxu0 0.0
    %189 = vmatpush1.msra.mxu0 0.0
    %190 = vmatprep.subr.mxu0 0.0
    %191 = vmatpush1.msra.mxu0 0.0
    %192 = vmatprep.subr.mxu0 0.0
    %193 = vmatpush1.msra.mxu0 0.0
    %194 = vmatprep.subr.mxu0 0.0
    %195 = vmatpush1.msra.mxu0 0.0
    %196 = vmatprep.subr.mxu0 0.0
    %197 = vmatpush1.msra.mxu0 0.0
    %198 = vmatprep.subr.mxu0 0.0
    %199 = vmatpush1.msra.mxu0 0.0
    %200 = vmatprep.subr.mxu0 0.0
    %201 = vmatpush1.msra.mxu0 0.0
    %202 = vmatprep.subr.mxu0 0.0
    %203 = vmatpush1.msra.mxu0 0.0
    %204 = vmatprep.subr.mxu0 0.0
    %205 = vmatpush1.msra.mxu0 0.0
    %206 = vmatprep.subr.mxu0 0.0
    %207 = vmatpush1.msra.mxu0 0.0
    %208 = vmatprep.subr.mxu0 0.0
    %209 = vmatpush1.msra.mxu0 0.0
    %210 = vmatprep.mubr.f32.mxu0 0.0
    %211 = vmatmul.mubr.f32.gmra.mrb[0].mxu0 %v122
    %v212 = vpop.f32.mrb[0].mxu0
    %v213 = vadd.f32 %v144, %v212
    %v214 = vpop.f32.mrb[0].mxu0
    %215 = vdwg.mxu0
    %v216 = vmax.f32 %v213, 0.0
    %v217 = vld [vmem:[%s5] sm:$0xff]
    %v218 = vld [vmem:[%s5 + $0x8] sm:$0xff]
    %v219 = vld [vmem:[%s5 + $0x10] sm:$0xff]
    %v220 = vld [vmem:[%s5 + $0x18] sm:$0xff]
    %v221 = vld [vmem:[%s5 + $0x20] sm:$0xff]
    %v222 = vld [vmem:[%s5 + $0x28] sm:$0xff]
    %v223 = vld [vmem:[%s5 + $0x30] sm:$0xff]
    %v224 = vld [vmem:[%s5 + $0x38] sm:$0xff]
    %v225 = vld [vmem:[%s5 + $0x40] sm:$0xff]
    %v226 = vld [vmem:[%s5 + $0x48] sm:$0xff]
    %v227 = vld [vmem:[%s5 + $0x50] sm:$0xff]
    %v228 = vld [vmem:[%s5 + $0x58] sm:$0xff]
    %v229 = vld [vmem:[%s5 + $0x60] sm:$0xff]
    %v230 = vld [vmem:[%s5 + $0x68] sm:$0xff]
    %v231 = vld [vmem:[%s5 + $0x70] sm:$0xff]
    %v232 = vld [vmem:[%s5 + $0x78] sm:$0xff]
    %v233 = vld [vmem:[%s6] sm:$0x1]
    %v235 = vlaneseq
    %v236 = vshrl.u32 %v235, 7
    %v237 = vsub.s32 0, %v236
    %v238 = vrot.slane %v233, %v237
    %240 = vmatprep.subr.mxu0 0.0
    %241 = vmatpush1.msra.mxu0 %v217
    %242 = vmatprep.subr.mxu0 0.0
    %243 = vmatpush1.msra.mxu0 %v218
    %244 = vmatprep.subr.mxu0 0.0
    %245 = vmatpush1.msra.mxu0 %v219
    %246 = vmatprep.subr.mxu0 0.0
    %247 = vmatpush1.msra.mxu0 %v220
    %248 = vmatprep.subr.mxu0 0.0
    %249 = vmatpush1.msra.mxu0 %v221
    %250 = vmatprep.subr.mxu0 0.0
    %251 = vmatpush1.msra.mxu0 %v222
    %252 = vmatprep.subr.mxu0 0.0
    %253 = vmatpush1.msra.mxu0 %v223
    %254 = vmatprep.subr.mxu0 0.0
    %255 = vmatpush1.msra.mxu0 %v224
    %256 = vmatprep.subr.mxu0 0.0
    %257 = vmatpush1.msra.mxu0 %v225
    %258 = vmatprep.subr.mxu0 0.0
    %259 = vmatpush1.msra.mxu0 %v226
    %260 = vmatprep.subr.mxu0 0.0
    %261 = vmatpush1.msra.mxu0 %v227
    %262 = vmatprep.subr.mxu0 0.0
    %263 = vmatpush1.msra.mxu0 %v228
    %264 = vmatprep.subr.mxu0 0.0
    %265 = vmatpush1.msra.mxu0 %v229
    %266 = vmatprep.subr.mxu0 0.0
    %267 = vmatpush1.msra.mxu0 %v230
    %268 = vmatprep.subr.mxu0 0.0
    %269 = vmatpush1.msra.mxu0 %v231
    %270 = vmatprep.subr.mxu0 0.0
    %271 = vmatpush1.msra.mxu0 %v232
    %272 = vmatprep.subr.mxu0 0.0
    %273 = vmatpush1.msra.mxu0 0.0
    %274 = vmatprep.subr.mxu0 0.0
    %275 = vmatpush1.msra.mxu0 0.0
    %276 = vmatprep.subr.mxu0 0.0
    %277 = vmatpush1.msra.mxu0 0.0
    %278 = vmatprep.subr.mxu0 0.0
    %279 = vmatpush1.msra.mxu0 0.0
    %280 = vmatprep.subr.mxu0 0.0
    %281 = vmatpush1.msra.mxu0 0.0
    %282 = vmatprep.subr.mxu0 0.0
    %283 = vmatpush1.msra.mxu0 0.0
    %284 = vmatprep.subr.mxu0 0.0
    %285 = vmatpush1.msra.mxu0 0.0
    %286 = vmatprep.subr.mxu0 0.0
    %287 = vmatpush1.msra.mxu0 0.0
    %288 = vmatprep.subr.mxu0 0.0
    %289 = vmatpush1.msra.mxu0 0.0
    %290 = vmatprep.subr.mxu0 0.0
    %291 = vmatpush1.msra.mxu0 0.0
    %292 = vmatprep.subr.mxu0 0.0
    %293 = vmatpush1.msra.mxu0 0.0
    %294 = vmatprep.subr.mxu0 0.0
    %295 = vmatpush1.msra.mxu0 0.0
    %296 = vmatprep.subr.mxu0 0.0
    %297 = vmatpush1.msra.mxu0 0.0
    %298 = vmatprep.subr.mxu0 0.0
    %299 = vmatpush1.msra.mxu0 0.0
    %300 = vmatprep.subr.mxu0 0.0
    %301 = vmatpush1.msra.mxu0 0.0
    %302 = vmatprep.subr.mxu0 0.0
    %303 = vmatpush1.msra.mxu0 0.0
    %304 = vmatprep.mubr.f32.mxu0 0.0
    %305 = vmatmul.mubr.f32.gmra.mrb[0].mxu0 %v216
    %v306 = vpop.f32.mrb[0].mxu0
    %v307 = vadd.f32 %v238, %v306
    %v308 = vpop.f32.mrb[0].mxu0
    %309 = vdwg.mxu0
    %310 = vst.msk [vmem:[#allocation5] sm:$0xff] %vm48, %v307
    // Predicated region
    $region34: #{tpu_custom_call.1} parent=1 // pred_check
      _
    $region35: #{tpu_custom_call.1} parent=1 // pred_check_branch
      %312 = sbr.rel (0) target = $region37
    $region36: #{tpu_custom_call.1} parent=1 // pred_region
      %s314 = ssub.s32 128, 128
      %315 = vsyncadd [#allocation4], %s314
      %s317 = sshll.u32 [#allocation5], 4
      %s318 = int_to_ptr.vmem [resolvable:$true] %s317
      %320 = dma.vmem_to_hbm [thread:$0]  %s318, 128, %s7, [#allocation4]
    $region37: #{tpu_custom_call.1} parent=1 // pred_fallthru
      _
    // Predicated region
    $region38: #{tpu_custom_call.1} parent=1 // pred_check
      _
    $region39: #{tpu_custom_call.1} parent=1 // pred_check_branch
      %322 = sbr.rel (0) target = $region41
    $region40: #{tpu_custom_call.1} parent=1 // pred_region
      %323 = dma.done [#allocation4], 128
    $region41: #{tpu_custom_call.1} parent=1 // pred_fallthru
      _
    %324 = vsyncpa [#allocation3], 1
    %325 = vsyncpa [#allocation4], 1

</llo_original>
